<compile_context>
chip_gen: v7x
topology: tpu7x:2x2x1
jax: 0.10.0
libtpu: 0.0.40
codegen_flags: <defaults>
</compile_context>

<pallas_src>
import functools

import jax
import jax.numpy as jnp
from jax.experimental import pallas as pl
from jax.experimental.pallas import tpu as pltpu


def _basic_conv_kernel(x_ref, w_ref, scale_ref, shift_ref, o_ref, xp_ref, *,
                       kh, stride, dilation, padding, ho, apply_relu):
    """Single grid step; everything resident in VMEM.

    x_ref:     (N, H, W*Cin)            channel-flattened input (MXU dtype)
    w_ref:     (KH, W*Cin, OutCols_p)   block-Toeplitz weights (MXU dtype)
    scale_ref: (1, OutCols_p)           folded BN scale, lane layout x*Cout+co
    shift_ref: (1, OutCols_p)           folded BN shift (+ conv bias)
    o_ref:     (N*Ho, OutCols_p)        lane-dense output
    xp_ref:    (N, H+2*pad, W*Cin)      VMEM scratch: H-zero-padded input
    """
    n, h, wcin = x_ref.shape
    m, out_cols = o_ref.shape

    # ---- stage the input with H zero-padding (lane-dense, offset-0 copies) --
    if padding > 0:
        xp_ref[...] = jnp.zeros(xp_ref.shape, xp_ref.dtype)
        xp_ref[:, padding:padding + h, :] = x_ref[...]
    else:
        xp_ref[...] = x_ref[...]

    def lhs(di):
        start = di * dilation
        if stride == 1:
            slab = xp_ref[:, start:start + ho, :]
        else:
            slab = xp_ref[:, pl.ds(start, ho, stride=stride), :]
        # Safe reshape: leading dims merge, minor (W*Cin) dim unchanged.
        return slab.reshape(m, wcin)

    # ---- KH accumulated MXU matmuls, f32 accumulation -----------------------
    acc = jnp.dot(lhs(0), w_ref[0], preferred_element_type=jnp.float32)
    for di in range(1, kh):
        acc = acc + jnp.dot(lhs(di), w_ref[di],
                            preferred_element_type=jnp.float32)

    # ---- folded BatchNorm (eval mode) + ReLU epilogue, f32 -------------------
    y = acc * scale_ref[...] + shift_ref[...]
    if apply_relu:
        y = jnp.maximum(y, 0.0)
    o_ref[...] = y.astype(o_ref.dtype)


def _toeplitz_rhs(weight, w_in, wo, stride, padding, dilation, out_cols_p,
                  dtype):
    """rhs[di, w*Cin+ci, x*Cout+co] = W[co,ci,di,dj]  iff  w == x*s - p + dj*d.

    Folds the W-direction padding/stride/dilation of the conv into a
    block-Toeplitz matrix so the kernel needs only KH plain matmuls.
    """
    cout, cin, kh, kw = weight.shape
    w_idx = jnp.arange(w_in)
    x_idx = jnp.arange(wo)
    dj_idx = jnp.arange(kw)
    src = (x_idx[None, None, :] * stride - padding
           + dj_idx[:, None, None] * dilation)              # (kw, 1, wo)
    sel = (w_idx[None, :, None] == src).astype(jnp.float32)  # (kw, W, Wo)
    rhs = jnp.einsum('jwx,oikj->kwixo', sel, weight.astype(jnp.float32))
    rhs = rhs.reshape(kh, w_in * cin, wo * cout)
    if out_cols_p > wo * cout:
        rhs = jnp.pad(rhs, ((0, 0), (0, 0), (0, out_cols_p - wo * cout)))
    return rhs.astype(dtype)


def basic_conv(x_nchw, weight, bn_gamma=None, bn_beta=None, bn_mean=None,
               bn_var=None, conv_bias=None, *, stride=1, padding=0,
               dilation=1, eps=1e-5, relu=True, bn=True,
               mxu_dtype=jnp.bfloat16):
    """BasicConv forward (eval-mode BN). x_nchw: (N,Cin,H,W); weight: (Cout,Cin,KH,KW)."""
    n, cin, h, w_in = x_nchw.shape
    cout, _, kh, kw = weight.shape

    ho = (h + 2 * padding - dilation * (kh - 1) - 1) // stride + 1
    wo = (w_in + 2 * padding - dilation * (kw - 1) - 1) // stride + 1
    out_cols = wo * cout
    out_cols_p = ((out_cols + 127) // 128) * 128   # lane-dense output minor dim
    m = n * ho                                     # batch folded into matmul M

    # Interface glue: NCHW -> (N, H, W*Cin) channel-flattened lane layout.
    x = jnp.transpose(x_nchw, (0, 2, 3, 1)).reshape(n, h, w_in * cin)
    x = x.astype(mxu_dtype)

    w_rhs = _toeplitz_rhs(weight, w_in, wo, stride, padding, dilation,
                          out_cols_p, mxu_dtype)

    # Fold eval-mode BN (+ conv bias) into per-channel scale/shift, expanded
    # to the (x*Cout + co) lane layout (f32 epilogue).
    if bn:
        scale_c = bn_gamma.astype(jnp.float32) / jnp.sqrt(
            bn_var.astype(jnp.float32) + eps)
        shift_c = (bn_beta.astype(jnp.float32)
                   - bn_mean.astype(jnp.float32) * scale_c)
        if conv_bias is not None:
            shift_c = shift_c + scale_c * conv_bias.astype(jnp.float32)
    else:
        scale_c = jnp.ones((cout,), jnp.float32)
        shift_c = (conv_bias.astype(jnp.float32) if conv_bias is not None
                   else jnp.zeros((cout,), jnp.float32))
    scale_l = jnp.pad(jnp.tile(scale_c, wo),
                      (0, out_cols_p - out_cols)).reshape(1, out_cols_p)
    shift_l = jnp.pad(jnp.tile(shift_c, wo),
                      (0, out_cols_p - out_cols)).reshape(1, out_cols_p)

    kernel = functools.partial(_basic_conv_kernel, kh=kh, stride=stride,
                               dilation=dilation, padding=padding, ho=ho,
                               apply_relu=relu)

    out2d = pl.pallas_call(
        kernel,
        out_shape=jax.ShapeDtypeStruct((m, out_cols_p), x_nchw.dtype),
        grid_spec=pltpu.PrefetchScalarGridSpec(
            num_scalar_prefetch=0,
            grid=(1,),
            in_specs=[
                pl.BlockSpec((n, h, w_in * cin), lambda i: (0, 0, 0)),
                pl.BlockSpec((kh, w_in * cin, out_cols_p),
                             lambda i: (0, 0, 0)),
                pl.BlockSpec((1, out_cols_p), lambda i: (0, 0)),
                pl.BlockSpec((1, out_cols_p), lambda i: (0, 0)),
            ],
            out_specs=pl.BlockSpec((m, out_cols_p), lambda i: (0, 0)),
            scratch_shapes=[
                pltpu.VMEM((n, h + 2 * padding, w_in * cin), mxu_dtype),
            ]),
        compiler_params=pltpu.CompilerParams(
            dimension_semantics=("arbitrary",)),
    )(x, w_rhs, scale_l, shift_l)

    # Interface glue: drop padded lanes, back to NCHW.
    out = out2d[:, :out_cols].reshape(n, ho, wo, cout)
    return jnp.transpose(out, (0, 3, 1, 2))


if __name__ == "__main__":
    # BasicConv(in_planes=4, out_planes=8, kernel_size=3, stride=1, padding=1)
    N, CIN, H, W = 2, 4, 16, 16
    COUT, K, STRIDE, PAD = 8, 3, 1, 1

    key = jax.random.PRNGKey(0)
    kx, kw_, kg, kb, km, kv = jax.random.split(key, 6)

    x = jax.random.normal(kx, (N, CIN, H, W), dtype=jnp.float32)
    weight = jax.random.normal(kw_, (COUT, CIN, K, K), dtype=jnp.float32) * 0.1
    bn_gamma = 1.0 + 0.1 * jax.random.normal(kg, (COUT,), dtype=jnp.float32)
    bn_beta = 0.1 * jax.random.normal(kb, (COUT,), dtype=jnp.float32)
    bn_mean = 0.1 * jax.random.normal(km, (COUT,), dtype=jnp.float32)
    bn_var = jnp.abs(1.0 + 0.1 * jax.random.normal(kv, (COUT,), jnp.float32))

    fwd = jax.jit(functools.partial(basic_conv, stride=STRIDE, padding=PAD,
                                    relu=True, bn=True))
    out = fwd(x, weight, bn_gamma, bn_beta, bn_mean, bn_var)
    out = jax.block_until_ready(out)
    assert out.shape == (N, COUT, H, W)

    # Eval-mode BN fold used by both references.
    inv_std = bn_gamma / jnp.sqrt(bn_var + 1e-5)
    scale = inv_std.reshape(1, COUT, 1, 1)
    shift = (bn_beta - bn_mean * inv_std).reshape(1, COUT, 1, 1)

    # Reference 1: matched precision (bf16 operands, f32 accumulation).
    conv_bf16 = jax.lax.conv_general_dilated(
        x.astype(jnp.bfloat16), weight.astype(jnp.bfloat16),
        window_strides=(STRIDE, STRIDE), padding=((PAD, PAD), (PAD, PAD)),
        dimension_numbers=("NCHW", "OIHW", "NCHW"),
        preferred_element_type=jnp.float32)
    ref_matched = jnp.maximum(conv_bf16 * scale + shift, 0.0)

    # Reference 2: full f32 (loose tolerance: bf16 MXU operands in the kernel).
    conv_f32 = jax.lax.conv_general_dilated(
        x, weight, window_strides=(STRIDE, STRIDE),
        padding=((PAD, PAD), (PAD, PAD)),
        dimension_numbers=("NCHW", "OIHW", "NCHW"))
    ref_f32 = jnp.maximum(conv_f32 * scale + shift, 0.0)

    err_matched = float(jnp.max(jnp.abs(out - ref_matched)))
    err_f32 = float(jnp.max(jnp.abs(out - ref_f32)))
    assert err_matched < 5e-3, f"matched-precision error too large: {err_matched}"
    assert err_f32 < 6e-2, f"f32-reference error too large: {err_f32}"

    print("KERNEL_OK")
</pallas_src>

<mosaic_0001>
module attributes {stable_mosaic.version = 11 : i64} {
  func.func @_basic_conv_kernel(%arg0: i32, %arg1: memref<2x16x64xbf16, #tpu.memory_space<vmem>>, %arg2: memref<3x64x128xbf16, #tpu.memory_space<vmem>>, %arg3: memref<1x128xf32, #tpu.memory_space<vmem>>, %arg4: memref<1x128xf32, #tpu.memory_space<vmem>>, %arg5: memref<32x128xf32, #tpu.memory_space<vmem>>, %arg6: memref<2x18x64xbf16, #tpu.memory_space<vmem>>) attributes {dimension_semantics = [#tpu.dimension_semantics<arbitrary>], iteration_bounds = array<i64: 1>, scalar_prefetch = 0 : i64, scratch_operands = 1 : i64, tpu.core_type = #tpu.core_type<tc>, window_params = [{pipeline_mode = #tpu.pipeline_mode<synchronous>, transform_indices = @transform_0, window_bounds = array<i64: 2, 16, 64>}, {pipeline_mode = #tpu.pipeline_mode<synchronous>, transform_indices = @transform_1, window_bounds = array<i64: 3, 64, 128>}, {pipeline_mode = #tpu.pipeline_mode<synchronous>, transform_indices = @transform_2, window_bounds = array<i64: 1, 128>}, {pipeline_mode = #tpu.pipeline_mode<synchronous>, transform_indices = @transform_3, window_bounds = array<i64: 1, 128>}, {pipeline_mode = #tpu.pipeline_mode<synchronous>, transform_indices = @transform_4, window_bounds = array<i64: 32, 128>}]} {
    %cst = arith.constant 0.000000e+00 : bf16
    %0 = vector.broadcast %cst : bf16 to vector<2x18x64xbf16>
    %c0 = arith.constant 0 : index
    %c0_0 = arith.constant 0 : index
    %c0_1 = arith.constant 0 : index
    %1 = vector.load %arg6[%c0, %c0_0, %c0_1] : memref<2x18x64xbf16, #tpu.memory_space<vmem>>, vector<2x18x64xbf16>
    tpu.vector_store %arg6[%c0, %c0_0, %c0_1], %0 {strides = array<i32>} : memref<2x18x64xbf16, #tpu.memory_space<vmem>>, vector<2x18x64xbf16>,
    %c0_2 = arith.constant 0 : index
    %c0_3 = arith.constant 0 : index
    %c0_4 = arith.constant 0 : index
    %2 = vector.load %arg1[%c0_2, %c0_3, %c0_4] : memref<2x16x64xbf16, #tpu.memory_space<vmem>>, vector<2x16x64xbf16>
    %c0_5 = arith.constant 0 : index
    %c1 = arith.constant 1 : index
    %c0_6 = arith.constant 0 : index
    %3 = vector.load %arg6[%c0_5, %c1, %c0_6] : memref<2x18x64xbf16, #tpu.memory_space<vmem>>, vector<2x16x64xbf16>
    tpu.vector_store %arg6[%c0_5, %c1, %c0_6], %2 {strides = array<i32>} : memref<2x18x64xbf16, #tpu.memory_space<vmem>>, vector<2x16x64xbf16>,
    %c0_7 = arith.constant 0 : index
    %c0_8 = arith.constant 0 : index
    %c0_9 = arith.constant 0 : index
    %4 = vector.load %arg6[%c0_7, %c0_8, %c0_9] : memref<2x18x64xbf16, #tpu.memory_space<vmem>>, vector<2x16x64xbf16>
    %5 = vector.shape_cast %4 : vector<2x16x64xbf16> to vector<32x64xbf16>
    %c0_10 = arith.constant 0 : index
    %c0_11 = arith.constant 0 : index
    %c0_12 = arith.constant 0 : index
    %6 = vector.load %arg2[%c0_10, %c0_11, %c0_12] : memref<3x64x128xbf16, #tpu.memory_space<vmem>>, vector<1x64x128xbf16>
    %7 = vector.shape_cast %6 : vector<1x64x128xbf16> to vector<64x128xbf16>
    %cst_13 = arith.constant dense<0.000000e+00> : vector<32x128xf32>
    %8 = tpu.matmul %5, %7, %cst_13 {dimension_numbers = #tpu.dot_dimension_numbers<[1], [0], [0], [1], [0, 0, 1, 1], [], []>} : vector<32x64xbf16>, vector<64x128xbf16>, vector<32x128xf32> -> vector<32x128xf32>
    %c0_14 = arith.constant 0 : index
    %c1_15 = arith.constant 1 : index
    %c0_16 = arith.constant 0 : index
    %9 = vector.load %arg6[%c0_14, %c1_15, %c0_16] : memref<2x18x64xbf16, #tpu.memory_space<vmem>>, vector<2x16x64xbf16>
    %10 = vector.shape_cast %9 : vector<2x16x64xbf16> to vector<32x64xbf16>
    %c1_17 = arith.constant 1 : index
    %c0_18 = arith.constant 0 : index
    %c0_19 = arith.constant 0 : index
    %11 = vector.load %arg2[%c1_17, %c0_18, %c0_19] : memref<3x64x128xbf16, #tpu.memory_space<vmem>>, vector<1x64x128xbf16>
    %12 = vector.shape_cast %11 : vector<1x64x128xbf16> to vector<64x128xbf16>
    %cst_20 = arith.constant dense<0.000000e+00> : vector<32x128xf32>
    %13 = tpu.matmul %10, %12, %cst_20 {dimension_numbers = #tpu.dot_dimension_numbers<[1], [0], [0], [1], [0, 0, 1, 1], [], []>} : vector<32x64xbf16>, vector<64x128xbf16>, vector<32x128xf32> -> vector<32x128xf32>
    %14 = arith.addf %8, %13 : vector<32x128xf32>
    %c0_21 = arith.constant 0 : index
    %c2 = arith.constant 2 : index
    %c0_22 = arith.constant 0 : index
    %15 = vector.load %arg6[%c0_21, %c2, %c0_22] : memref<2x18x64xbf16, #tpu.memory_space<vmem>>, vector<2x16x64xbf16>
    %16 = vector.shape_cast %15 : vector<2x16x64xbf16> to vector<32x64xbf16>
    %c2_23 = arith.constant 2 : index
    %c0_24 = arith.constant 0 : index
    %c0_25 = arith.constant 0 : index
    %17 = vector.load %arg2[%c2_23, %c0_24, %c0_25] : memref<3x64x128xbf16, #tpu.memory_space<vmem>>, vector<1x64x128xbf16>
    %18 = vector.shape_cast %17 : vector<1x64x128xbf16> to vector<64x128xbf16>
    %cst_26 = arith.constant dense<0.000000e+00> : vector<32x128xf32>
    %19 = tpu.matmul %16, %18, %cst_26 {dimension_numbers = #tpu.dot_dimension_numbers<[1], [0], [0], [1], [0, 0, 1, 1], [], []>} : vector<32x64xbf16>, vector<64x128xbf16>, vector<32x128xf32> -> vector<32x128xf32>
    %20 = arith.addf %14, %19 : vector<32x128xf32>
    %c0_27 = arith.constant 0 : index
    %c0_28 = arith.constant 0 : index
    %21 = vector.load %arg3[%c0_27, %c0_28] : memref<1x128xf32, #tpu.memory_space<vmem>>, vector<1x128xf32>
    %22 = vector.broadcast %21 : vector<1x128xf32> to vector<32x128xf32>
    %23 = arith.mulf %20, %22 : vector<32x128xf32>
    %c0_29 = arith.constant 0 : index
    %c0_30 = arith.constant 0 : index
    %24 = vector.load %arg4[%c0_29, %c0_30] : memref<1x128xf32, #tpu.memory_space<vmem>>, vector<1x128xf32>
    %25 = vector.broadcast %24 : vector<1x128xf32> to vector<32x128xf32>
    %26 = arith.addf %23, %25 : vector<32x128xf32>
    %cst_31 = arith.constant 0.000000e+00 : f32
    %27 = vector.broadcast %cst_31 : f32 to vector<32x128xf32>
    %28 = arith.maximumf %26, %27 : vector<32x128xf32>
    %c0_32 = arith.constant 0 : index
    %c0_33 = arith.constant 0 : index
    %29 = vector.load %arg5[%c0_32, %c0_33] : memref<32x128xf32, #tpu.memory_space<vmem>>, vector<32x128xf32>
    tpu.vector_store %arg5[%c0_32, %c0_33], %28 {strides = array<i32>} : memref<32x128xf32, #tpu.memory_space<vmem>>, vector<32x128xf32>,
    return
  }
  func.func @transform_0(%arg0: i32) -> (i32, i32, i32) {
    %c0_i32 = arith.constant 0 : i32
    %c0_i32_0 = arith.constant 0 : i32
    %c0_i32_1 = arith.constant 0 : i32
    %c0_i32_2 = arith.constant 0 : i32
    return %c0_i32, %c0_i32_0, %c0_i32_1 : i32, i32, i32
  }
  func.func @transform_1(%arg0: i32) -> (i32, i32, i32) {
    %c0_i32 = arith.constant 0 : i32
    %c0_i32_0 = arith.constant 0 : i32
    %c0_i32_1 = arith.constant 0 : i32
    %c0_i32_2 = arith.constant 0 : i32
    return %c0_i32, %c0_i32_0, %c0_i32_1 : i32, i32, i32
  }
  func.func @transform_2(%arg0: i32) -> (i32, i32) {
    %c0_i32 = arith.constant 0 : i32
    %c0_i32_0 = arith.constant 0 : i32
    %c0_i32_1 = arith.constant 0 : i32
    return %c0_i32, %c0_i32_0 : i32, i32
  }
  func.func @transform_3(%arg0: i32) -> (i32, i32) {
    %c0_i32 = arith.constant 0 : i32
    %c0_i32_0 = arith.constant 0 : i32
    %c0_i32_1 = arith.constant 0 : i32
    return %c0_i32, %c0_i32_0 : i32, i32
  }
  func.func @transform_4(%arg0: i32) -> (i32, i32) {
    %c0_i32 = arith.constant 0 : i32
    %c0_i32_0 = arith.constant 0 : i32
    %c0_i32_1 = arith.constant 0 : i32
    return %c0_i32, %c0_i32_0 : i32, i32
  }
}

</mosaic_0001>

<llo_original>
// kernel: tile.13
$region0: #{tile.13}
  #allocation0 [shape = 's32[1]{0}', space=sflag, size = 0x4, scoped, tag = 'scoped memory for tile.13']
  %s0 = inlined_call_operand.vmem [shape: f32[8], index: 0, kind: input, shape index: {}]
  %s1 = inlined_call_operand.vmem [shape: f32[16,8], index: 1, kind: output, shape index: {}]
  // Predicated region
  $region2: #{tile.13} parent=0 // pred_check
    _
  $region3: #{tile.13} parent=0 // pred_check_branch
    %3 = sbr.rel (0) target = $region5
  $region4: #{tile.13} parent=0 // pred_region
    _
  $region5: #{tile.13} parent=0 // pred_fallthru
    _
  %v4 = vld [vmem:[%s0] ss:$0 sm:$0xff]
  %5 = vst [vmem:[%s1] sm:$0xff] %v4
  %s6 = scalar_lea.vmem %s1, 8
  %7 = vst [vmem:[%s6] sm:$0xff] %v4

// kernel: basic_conv.1
$region0: #{basic_conv.1}
  #allocation0 [shape = 'u32[]', space=smem, size = 0x4, offset = 0x4, fixed_abs, tag = 'smem constant byte address 0x4 - core index']
  #allocation1 [shape = 'u32[144,128]{1,0:T(1,128)}', space=vmem, size = 0x12000, scoped, tag = 'internal scratch']
  #allocation2 [shape = 'bf16[2,18,64]{2,1,0:T(8,128)(2,1)}', space=vmem, size = 0x3000, scoped, tag = 'scratch operand']
  %s0 = inlined_call_operand.vmem [shape: bf16[2,16,64], index: 0, kind: input, shape index: {}]
  %s1 = inlined_call_operand.vmem [shape: bf16[3,64,128], index: 1, kind: input, shape index: {}]
  %s2 = inlined_call_operand.vmem [shape: f32[1,128], index: 2, kind: input, shape index: {}]
  %s3 = inlined_call_operand.vmem [shape: f32[1,128], index: 3, kind: input, shape index: {}]
  %s4 = inlined_call_operand.vmem [shape: f32[32,128], index: 4, kind: output, shape index: {}]
  %s5 = sld [smem:[#allocation0]]
  $region26: #{basic_conv.1} parent=0
    _
  %s7 = ssub.s32 1, %s5
  %s8 = scalar_select 0, %s7, %s5
  // Predicated region
  $region2: #{basic_conv.1} parent=0 // pred_check
    _
  $region3: #{basic_conv.1} parent=0 // pred_check_branch
    %10 = sbr.rel (0) target = $region5
  $region4: #{basic_conv.1} parent=0 // pred_region
    _
  $region5: #{basic_conv.1} parent=0 // pred_fallthru
    _
  // Predicated region
  $region6: #{basic_conv.1} parent=0 // pred_check
    _
  $region7: #{basic_conv.1} parent=0 // pred_check_branch
    %12 = sbr.rel (0) target = $region9
  $region8: #{basic_conv.1} parent=0 // pred_region
    _
  $region9: #{basic_conv.1} parent=0 // pred_fallthru
    _
  // Predicated region
  $region10: #{basic_conv.1} parent=0 // pred_check
    _
  $region11: #{basic_conv.1} parent=0 // pred_check_branch
    %14 = sbr.rel (0) target = $region13
  $region12: #{basic_conv.1} parent=0 // pred_region
    _
  $region13: #{basic_conv.1} parent=0 // pred_fallthru
    _
  // Predicated region
  $region14: #{basic_conv.1} parent=0 // pred_check
    _
  $region15: #{basic_conv.1} parent=0 // pred_check_branch
    %16 = sbr.rel (0) target = $region17
  $region16: #{basic_conv.1} parent=0 // pred_region
    _
  $region17: #{basic_conv.1} parent=0 // pred_fallthru
    _
  %vm18 = vcmask 519168
  %19 = vst.msk [vmem:[#allocation2] sm:$0xf] %vm18, 0
  %20 = vst.msk [vmem:[#allocation2 + $0x4] sm:$0xf] %vm18, 0
  %vm21 = vcmask 516096
  %22 = vst.msk [vmem:[#allocation2 + $0x8] sm:$0x1] %vm21, 0
  %23 = vst.msk [vmem:[#allocation2 + $0xc] sm:$0xf] %vm18, 0
  %24 = vst.msk [vmem:[#allocation2 + $0x10] sm:$0xf] %vm18, 0
  %25 = vst.msk [vmem:[#allocation2 + $0x14] sm:$0x1] %vm21, 0
  %v26 = vld [vmem:[%s0] sm:$0xf]
  %v27 = vld [vmem:[%s0 + $0x4] sm:$0xf]
  %v28 = vld [vmem:[%s0 + $0x8] sm:$0xf]
  %v29 = vld [vmem:[%s0 + $0xc] sm:$0xf]
  %vm30 = vsmask.f32 256
  %vm31 = vsmask.f32 4368
  %vm32 = vmor %vm30, %vm31
  %v34 = vshrl.u32 %v26, 16
  %v36 = vrot.slane %v34, 7
  %v37 = vshll.u32 %v26, 16
  %v39 = vor.u32 %v36, %v37
  %v40 = vrot.slane %v36, 4
  %v42 = vshrl.u32 %v27, 16
  %v44 = vrot.slane %v42, 7
  %v45 = vshll.u32 %v27, 16
  %v47 = vor.u32 %v44, %v45
  %v48 = vsel %vm32, %v40, %v47
  %v49 = vrot.slane %v44, 4
  %v51 = vshrl.u32 %v28, 16
  %v53 = vrot.slane %v51, 7
  %v54 = vshll.u32 %v28, 16
  %v56 = vor.u32 %v53, %v54
  %v57 = vrot.slane %v53, 4
  %v59 = vshrl.u32 %v29, 16
  %v61 = vrot.slane %v59, 7
  %v62 = vshll.u32 %v29, 16
  %v64 = vor.u32 %v61, %v62
  %v65 = vsel %vm32, %v57, %v64
  %v66 = vrot.slane %v61, 4
  %vm73 = vcmask 519168
  %vm74 = vsmask.f32 7938
  %vm75 = vmand %vm73, %vm74
  %v76 = vld [vmem:[#allocation2] sm:$0xf]
  %v77 = vsel %vm75, %v39, %v76
  %78 = vst [vmem:[#allocation2] sm:$0xf] %v77
  %79 = vst.msk [vmem:[#allocation2 + $0x4] sm:$0xf] %vm18, %v48
  %vm80 = vcmask 516096
  %vm81 = vmand %vm80, %vm30
  %v82 = vld [vmem:[#allocation2 + $0x8] sm:$0x1]
  %v83 = vsel %vm81, %v49, %v82
  %84 = vst [vmem:[#allocation2 + $0x8] sm:$0x1] %v83
  %v85 = vld [vmem:[#allocation2 + $0xc] sm:$0xf]
  %v86 = vsel %vm75, %v56, %v85
  %87 = vst [vmem:[#allocation2 + $0xc] sm:$0xf] %v86
  %88 = vst.msk [vmem:[#allocation2 + $0x10] sm:$0xf] %vm18, %v65
  %v89 = vld [vmem:[#allocation2 + $0x14] sm:$0x1]
  %v90 = vsel %vm81, %v66, %v89
  %91 = vst [vmem:[#allocation2 + $0x14] sm:$0x1] %v90
  %v92 = vld [vmem:[#allocation2] sm:$0xf]
  %v93 = vld [vmem:[#allocation2 + $0x4] sm:$0xf]
  %v94 = vld [vmem:[#allocation2 + $0xc] sm:$0xf]
  %v95 = vld [vmem:[#allocation2 + $0x10] sm:$0xf]
  %v96 = vld [vmem:[%s1] sm:$0xf]
  %v97 = vld [vmem:[%s1 + $0x4] sm:$0xf]
  %v98 = vld [vmem:[%s1 + $0x8] sm:$0xf]
  %v99 = vld [vmem:[%s1 + $0xc] sm:$0xf]
  %v100 = vld [vmem:[%s1 + $0x10] sm:$0xf]
  %v101 = vld [vmem:[%s1 + $0x14] sm:$0xf]
  %v102 = vld [vmem:[%s1 + $0x18] sm:$0xf]
  %v103 = vld [vmem:[%s1 + $0x1c] sm:$0xf]
  %v104 = vld [vmem:[#allocation2 + $0x8] sm:$0x1]
  %v105 = vld [vmem:[#allocation2 + $0x14] sm:$0x1]
  %vm106 = vsmask.f32 3328
  %vm107 = vsmask.f32 7440
  %vm108 = vmor %vm106, %vm107
  %v110 = vshrl.u32 %v92, 16
  %v112 = vrot.slane %v110, 4
  %v113 = vshll.u32 %v92, 16
  %v115 = vrot.slane %v113, 5
  %v116 = vor.u32 %v112, %v115
  %v117 = vrot.slane %v116, 4
  %v119 = vshll.u32 %v93, 16
  %v121 = vrot.slane %v119, 5
  %v122 = vsel %vm108, %v117, %v121
  %v123 = vshrl.u32 %v93, 16
  %v125 = vrot.slane %v123, 4
  %v126 = vor.u32 %v125, %v121
  %v127 = vrot.slane %v126, 4
  %v129 = vshll.u32 %v104, 16
  %v131 = vrot.slane %v129, 5
  %v132 = vsel %vm108, %v127, %v131
  %v134 = vshrl.u32 %v94, 16
  %v136 = vrot.slane %v134, 4
  %v137 = vshll.u32 %v94, 16
  %v139 = vrot.slane %v137, 5
  %v140 = vor.u32 %v136, %v139
  %v141 = vrot.slane %v140, 4
  %v143 = vshll.u32 %v95, 16
  %v145 = vrot.slane %v143, 5
  %v146 = vsel %vm108, %v141, %v145
  %v147 = vshrl.u32 %v95, 16
  %v149 = vrot.slane %v147, 4
  %v150 = vor.u32 %v149, %v145
  %v151 = vrot.slane %v150, 4
  %v153 = vshll.u32 %v105, 16
  %v155 = vrot.slane %v153, 5
  %v156 = vsel %vm108, %v151, %v155
  %s157 = scalar_lea.vmem %s1, 32
  %v158 = vld [vmem:[%s157] sm:$0xf]
  %v159 = vld [vmem:[%s157 + $0x4] sm:$0xf]
  %v160 = vld [vmem:[%s157 + $0x8] sm:$0xf]
  %v161 = vld [vmem:[%s157 + $0xc] sm:$0xf]
  %v162 = vld [vmem:[%s157 + $0x10] sm:$0xf]
  %v163 = vld [vmem:[%s157 + $0x14] sm:$0xf]
  %v164 = vld [vmem:[%s157 + $0x18] sm:$0xf]
  %v165 = vld [vmem:[%s157 + $0x1c] sm:$0xf]
  %v166 = vunpack.c.l.b16 %v122
  %v167 = vunpack.c.l.b16 %v132
  %v168 = vunpack.c.l.b16 %v146
  %v169 = vunpack.c.l.b16 %v156
  %v170 = vpack.c.b16 %v167, %v166
  %v171 = vpack.c.b16 %v169, %v168
  %v180 = vunpack.c.l.b16 %v158
  %v181 = vunpack.c.l.b16 %v159
  %v182 = vunpack.c.l.b16 %v160
  %v183 = vunpack.c.l.b16 %v161
  %v184 = vunpack.c.l.b16 %v162
  %v185 = vunpack.c.l.b16 %v163
  %v186 = vunpack.c.l.b16 %v164
  %v187 = vunpack.c.l.b16 %v165
  %v188 = vpack.c.b16 %v181, %v180
  %v189 = vpack.c.b16 %v183, %v182
  %v190 = vpack.c.b16 %v185, %v184
  %v191 = vpack.c.b16 %v187, %v186
  %vm196 = vcmask 523264
  %v198 = vsel %vm196, %v170, 0
  %v201 = vsel %vm196, %v171, 0
  %203 = vmatprep.subr.bf16.mxu0 0
  %204 = vmatpush1.bf16.msra.mxu0 %v188
  %205 = vmatprep.subr.bf16.mxu0 0
  %206 = vmatpush1.bf16.msra.mxu0 %v189
  %207 = vmatprep.subr.bf16.mxu0 0
  %208 = vmatpush1.bf16.msra.mxu0 %v190
  %209 = vmatprep.subr.bf16.mxu0 0
  %210 = vmatpush1.bf16.msra.mxu0 %v191
  %211 = vmatprep.subr.bf16.mxu0 0
  %212 = vmatpush1.bf16.msra.mxu0 0
  %213 = vmatprep.subr.bf16.mxu0 0
  %214 = vmatpush1.bf16.msra.mxu0 0
  %215 = vmatprep.subr.bf16.mxu0 0
  %216 = vmatpush1.bf16.msra.mxu0 0
  %217 = vmatprep.subr.bf16.mxu0 0
  %218 = vmatpush1.bf16.msra.mxu0 0
  %219 = vmatprep.subr.bf16.mxu0 0
  %220 = vmatpush1.bf16.msra.mxu0 0
  %221 = vmatprep.subr.bf16.mxu0 0
  %222 = vmatpush1.bf16.msra.mxu0 0
  %223 = vmatprep.subr.bf16.mxu0 0
  %224 = vmatpush1.bf16.msra.mxu0 0
  %225 = vmatprep.subr.bf16.mxu0 0
  %226 = vmatpush1.bf16.msra.mxu0 0
  %227 = vmatprep.subr.bf16.mxu0 0
  %228 = vmatpush1.bf16.msra.mxu0 0
  %229 = vmatprep.subr.bf16.mxu0 0
  %230 = vmatpush1.bf16.msra.mxu0 0
  %231 = vmatprep.subr.bf16.mxu0 0
  %232 = vmatpush1.bf16.msra.mxu0 0
  %233 = vmatprep.subr.bf16.mxu0 0
  %234 = vmatpush1.bf16.msra.mxu0 0
  %235 = vmatprep.mubr.bf16.mxu0 0
  %236 = vmatmul.mubr.bf16.gmra.mrb[0].mxu0 %v198
  %v237 = vpop.f32.mrb[0].mxu0
  %v238 = vadd.f32 0.0, %v237
  %v239 = vpop.f32.mrb[0].mxu0
  %v240 = vpop.f32.mrb[0].mxu0
  %v241 = vadd.f32 0.0, %v240
  %v242 = vpop.f32.mrb[0].mxu0
  %243 = vmatprep.mubr.bf16.mxu0 0
  %244 = vmatmul.mubr.bf16.gmra.mrb[0].mxu0 %v201
  %v245 = vpop.f32.mrb[0].mxu0
  %v246 = vadd.f32 0.0, %v245
  %v247 = vpop.f32.mrb[0].mxu0
  %v248 = vpop.f32.mrb[0].mxu0
  %v249 = vadd.f32 0.0, %v248
  %v250 = vpop.f32.mrb[0].mxu0
  %251 = vdwg.mxu0
  %v256 = vunpack.c.l.b16 %v92
  %v257 = vunpack.c.l.b16 %v93
  %v258 = vunpack.c.l.b16 %v94
  %v259 = vunpack.c.l.b16 %v95
  %v260 = vpack.c.b16 %v257, %v256
  %v261 = vpack.c.b16 %v259, %v258
  %v270 = vunpack.c.l.b16 %v96
  %v271 = vunpack.c.l.b16 %v97
  %v272 = vunpack.c.l.b16 %v98
  %v273 = vunpack.c.l.b16 %v99
  %v274 = vunpack.c.l.b16 %v100
  %v275 = vunpack.c.l.b16 %v101
  %v276 = vunpack.c.l.b16 %v102
  %v277 = vunpack.c.l.b16 %v103
  %v278 = vpack.c.b16 %v271, %v270
  %v279 = vpack.c.b16 %v273, %v272
  %v280 = vpack.c.b16 %v275, %v274
  %v281 = vpack.c.b16 %v277, %v276
  %v287 = vsel %vm196, %v260, 0
  %v290 = vsel %vm196, %v261, 0
  %292 = vmatprep.subr.bf16.mxu0 0
  %293 = vmatpush1.bf16.msra.mxu0 %v278
  %294 = vmatprep.subr.bf16.mxu0 0
  %295 = vmatpush1.bf16.msra.mxu0 %v279
  %296 = vmatprep.subr.bf16.mxu0 0
  %297 = vmatpush1.bf16.msra.mxu0 %v280
  %298 = vmatprep.subr.bf16.mxu0 0
  %299 = vmatpush1.bf16.msra.mxu0 %v281
  %300 = vmatprep.subr.bf16.mxu0 0
  %301 = vmatpush1.bf16.msra.mxu0 0
  %302 = vmatprep.subr.bf16.mxu0 0
  %303 = vmatpush1.bf16.msra.mxu0 0
  %304 = vmatprep.subr.bf16.mxu0 0
  %305 = vmatpush1.bf16.msra.mxu0 0
  %306 = vmatprep.subr.bf16.mxu0 0
  %307 = vmatpush1.bf16.msra.mxu0 0
  %308 = vmatprep.subr.bf16.mxu0 0
  %309 = vmatpush1.bf16.msra.mxu0 0
  %310 = vmatprep.subr.bf16.mxu0 0
  %311 = vmatpush1.bf16.msra.mxu0 0
  %312 = vmatprep.subr.bf16.mxu0 0
  %313 = vmatpush1.bf16.msra.mxu0 0
  %314 = vmatprep.subr.bf16.mxu0 0
  %315 = vmatpush1.bf16.msra.mxu0 0
  %316 = vmatprep.subr.bf16.mxu0 0
  %317 = vmatpush1.bf16.msra.mxu0 0
  %318 = vmatprep.subr.bf16.mxu0 0
  %319 = vmatpush1.bf16.msra.mxu0 0
  %320 = vmatprep.subr.bf16.mxu0 0
  %321 = vmatpush1.bf16.msra.mxu0 0
  %322 = vmatprep.subr.bf16.mxu0 0
  %323 = vmatpush1.bf16.msra.mxu0 0
  %324 = vmatprep.mubr.bf16.mxu0 0
  %325 = vmatmul.mubr.bf16.gmra.mrb[0].mxu0 %v287
  %v326 = vpop.f32.mrb[0].mxu0
  %v327 = vadd.f32 %v238, %v326
  %v328 = vpop.f32.mrb[0].mxu0
  %v329 = vpop.f32.mrb[0].mxu0
  %v330 = vadd.f32 %v241, %v329
  %v331 = vpop.f32.mrb[0].mxu0
  %332 = vmatprep.mubr.bf16.mxu0 0
  %333 = vmatmul.mubr.bf16.gmra.mrb[0].mxu0 %v290
  %v334 = vpop.f32.mrb[0].mxu0
  %v335 = vadd.f32 %v246, %v334
  %v336 = vpop.f32.mrb[0].mxu0
  %v337 = vpop.f32.mrb[0].mxu0
  %v338 = vadd.f32 %v249, %v337
  %v339 = vpop.f32.mrb[0].mxu0
  %340 = vdwg.mxu0
  %v341 = vld [vmem:[#allocation2] sm:$0xe]
  %v342 = vld [vmem:[#allocation2 + $0xc] sm:$0xe]
  %vm347 = vcmask 1042432
  %vm348 = vcmask 1046532
  %vm349 = vmor %vm347, %vm348
  %v350 = vrot.slane %v341, 5
  %v351 = vrot.slane %v350, 4
  %v352 = vrot.slane %v93, 5
  %v353 = vsel %vm349, %v351, %v352
  %v354 = vrot.slane %v352, 4
  %v355 = vrot.slane %v104, 5
  %v356 = vsel %vm349, %v354, %v355
  %v357 = vrot.slane %v342, 5
  %v358 = vrot.slane %v357, 4
  %v359 = vrot.slane %v95, 5
  %v360 = vsel %vm349, %v358, %v359
  %v361 = vrot.slane %v359, 4
  %v362 = vrot.slane %v105, 5
  %v363 = vsel %vm349, %v361, %v362
  %s364 = scalar_lea.vmem %s1, 64
  %v365 = vld [vmem:[%s364] sm:$0xf]
  %v366 = vld [vmem:[%s364 + $0x4] sm:$0xf]
  %v367 = vld [vmem:[%s364 + $0x8] sm:$0xf]
  %v368 = vld [vmem:[%s364 + $0xc] sm:$0xf]
  %v369 = vld [vmem:[%s364 + $0x10] sm:$0xf]
  %v370 = vld [vmem:[%s364 + $0x14] sm:$0xf]
  %v371 = vld [vmem:[%s364 + $0x18] sm:$0xf]
  %v372 = vld [vmem:[%s364 + $0x1c] sm:$0xf]
  %v373 = vunpack.c.l.b16 %v353
  %v374 = vunpack.c.l.b16 %v356
  %v375 = vunpack.c.l.b16 %v360
  %v376 = vunpack.c.l.b16 %v363
  %v377 = vpack.c.b16 %v374, %v373
  %v378 = vpack.c.b16 %v376, %v375
  %v387 = vunpack.c.l.b16 %v365
  %v388 = vunpack.c.l.b16 %v366
  %v389 = vunpack.c.l.b16 %v367
  %v390 = vunpack.c.l.b16 %v368
  %v391 = vunpack.c.l.b16 %v369
  %v392 = vunpack.c.l.b16 %v370
  %v393 = vunpack.c.l.b16 %v371
  %v394 = vunpack.c.l.b16 %v372
  %v395 = vpack.c.b16 %v388, %v387
  %v396 = vpack.c.b16 %v390, %v389
  %v397 = vpack.c.b16 %v392, %v391
  %v398 = vpack.c.b16 %v394, %v393
  %v404 = vsel %vm196, %v377, 0
  %v407 = vsel %vm196, %v378, 0
  %409 = vmatprep.subr.bf16.mxu0 0
  %410 = vmatpush1.bf16.msra.mxu0 %v395
  %411 = vmatprep.subr.bf16.mxu0 0
  %412 = vmatpush1.bf16.msra.mxu0 %v396
  %413 = vmatprep.subr.bf16.mxu0 0
  %414 = vmatpush1.bf16.msra.mxu0 %v397
  %415 = vmatprep.subr.bf16.mxu0 0
  %416 = vmatpush1.bf16.msra.mxu0 %v398
  %417 = vmatprep.subr.bf16.mxu0 0
  %418 = vmatpush1.bf16.msra.mxu0 0
  %419 = vmatprep.subr.bf16.mxu0 0
  %420 = vmatpush1.bf16.msra.mxu0 0
  %421 = vmatprep.subr.bf16.mxu0 0
  %422 = vmatpush1.bf16.msra.mxu0 0
  %423 = vmatprep.subr.bf16.mxu0 0
  %424 = vmatpush1.bf16.msra.mxu0 0
  %425 = vmatprep.subr.bf16.mxu0 0
  %426 = vmatpush1.bf16.msra.mxu0 0
  %427 = vmatprep.subr.bf16.mxu0 0
  %428 = vmatpush1.bf16.msra.mxu0 0
  %429 = vmatprep.subr.bf16.mxu0 0
  %430 = vmatpush1.bf16.msra.mxu0 0
  %431 = vmatprep.subr.bf16.mxu0 0
  %432 = vmatpush1.bf16.msra.mxu0 0
  %433 = vmatprep.subr.bf16.mxu0 0
  %434 = vmatpush1.bf16.msra.mxu0 0
  %435 = vmatprep.subr.bf16.mxu0 0
  %436 = vmatpush1.bf16.msra.mxu0 0
  %437 = vmatprep.subr.bf16.mxu0 0
  %438 = vmatpush1.bf16.msra.mxu0 0
  %439 = vmatprep.subr.bf16.mxu0 0
  %440 = vmatpush1.bf16.msra.mxu0 0
  %441 = vmatprep.mubr.bf16.mxu0 0
  %442 = vmatmul.mubr.bf16.gmra.mrb[0].mxu0 %v404
  %v443 = vpop.f32.mrb[0].mxu0
  %v444 = vadd.f32 0.0, %v443
  %v445 = vpop.f32.mrb[0].mxu0
  %v446 = vpop.f32.mrb[0].mxu0
  %v447 = vadd.f32 0.0, %v446
  %v448 = vpop.f32.mrb[0].mxu0
  %449 = vmatprep.mubr.bf16.mxu0 0
  %450 = vmatmul.mubr.bf16.gmra.mrb[0].mxu0 %v407
  %v451 = vpop.f32.mrb[0].mxu0
  %v452 = vadd.f32 0.0, %v451
  %v453 = vpop.f32.mrb[0].mxu0
  %v454 = vpop.f32.mrb[0].mxu0
  %v455 = vadd.f32 0.0, %v454
  %v456 = vpop.f32.mrb[0].mxu0
  %457 = vdwg.mxu0
  %v458 = vadd.f32 %v327, %v444
  %v459 = vadd.f32 %v330, %v447
  %v460 = vadd.f32 %v335, %v452
  %v461 = vadd.f32 %v338, %v455
  %v462 = vld [vmem:[%s2] sm:$0x1]
  %v464 = vlaneseq
  %v465 = vshrl.u32 %v464, 7
  %v466 = vsub.s32 0, %v465
  %v467 = vrot.slane %v462, %v466
  %v469 = vmul.f32 %v458, %v467
  %v470 = vmul.f32 %v459, %v467
  %v471 = vmul.f32 %v460, %v467
  %v472 = vmul.f32 %v461, %v467
  %v473 = vld [vmem:[%s3] sm:$0x1]
  %v475 = vlaneseq
  %v476 = vshrl.u32 %v475, 7
  %v477 = vsub.s32 0, %v476
  %v478 = vrot.slane %v473, %v477
  %v480 = vadd.f32 %v469, %v478
  %v481 = vadd.f32 %v470, %v478
  %v482 = vadd.f32 %v471, %v478
  %v483 = vadd.f32 %v472, %v478
  %v484 = vmax.f32 %v480, 0.0
  %v485 = vmax.f32 %v481, 0.0
  %v486 = vmax.f32 %v482, 0.0
  %v487 = vmax.f32 %v483, 0.0
  %488 = vst [vmem:[%s4] sm:$0xff] %v484
  %489 = vst [vmem:[%s4 + $0x8] sm:$0xff] %v485
  %490 = vst [vmem:[%s4 + $0x10] sm:$0xff] %v486
  %491 = vst [vmem:[%s4 + $0x18] sm:$0xff] %v487
  // Predicated region
  $region18: #{basic_conv.1} parent=0 // pred_check
    _
  $region19: #{basic_conv.1} parent=0 // pred_check_branch
    %493 = sbr.rel (0) target = $region21
  $region20: #{basic_conv.1} parent=0 // pred_region
    _
  $region21: #{basic_conv.1} parent=0 // pred_fallthru
    _
  // Predicated region
  $region22: #{basic_conv.1} parent=0 // pred_check
    _
  $region23: #{basic_conv.1} parent=0 // pred_check_branch
    %495 = sbr.rel (0) target = $region25
  $region24: #{basic_conv.1} parent=0 // pred_region
    _
  $region25: #{basic_conv.1} parent=0 // pred_fallthru
    _

</llo_original>
